<compile_context>
chip_gen: v7x
topology: tpu7x:2x2x1
jax: 0.10.0
libtpu: 0.0.40
codegen_flags: <defaults>
</compile_context>

<pallas_src>
import re

import jax
import jax.numpy as jnp
from jax.experimental import pallas as pl
from jax.experimental.pallas import tpu as pltpu

BLOCK_ROWS = 512                    # (512, 128) f32 block = 256 KiB per grid step
LANES = 128
BLOCK_ELEMS = BLOCK_ROWS * LANES
_EXCLUDE_REGEX = re.compile(r"bn|bias|activation")


def _l2_norms_kernel(pid_ref, x_ref, o_ref, acc_ref):
    """Fused per-parameter sum-of-squares + sqrt.

    pid_ref : SMEM int32[total_blocks]  -- parameter id of each grid step.
    x_ref   : VMEM f32[BLOCK_ROWS, 128] -- current data block.
    o_ref   : VMEM f32[1, 1, 128]       -- output row for the current parameter.
    acc_ref : VMEM f32[BLOCK_ROWS, 128] -- running sum-of-squares accumulator.
    """
    i = pl.program_id(0)
    n = pl.num_programs(0)
    pid = pid_ref[i]
    prev_pid = pid_ref[jnp.maximum(i - 1, 0)]
    next_pid = pid_ref[jnp.minimum(i + 1, n - 1)]
    first_of_param = jnp.logical_or(i == 0, prev_pid != pid)
    last_of_param = jnp.logical_or(i == n - 1, next_pid != pid)

    @pl.when(first_of_param)
    def _():
        acc_ref[...] = jnp.zeros_like(acc_ref)

    # Hot loop: pure VPU (mul + add) fed by the vector-load slot.
    x = x_ref[...]
    acc_ref[...] += x * x

    @pl.when(last_of_param)
    def _():
        # One XLU reduction + one sqrt per parameter (amortized).
        norm = jnp.sqrt(jnp.sum(acc_ref[...]))
        o_ref[...] = jnp.full(o_ref.shape, norm, dtype=o_ref.dtype)


def l2_regularization(named_params, reg_lambda):
    """Pallas equivalent of L2Regulaization.forward(model).

    named_params: dict[str, jnp.ndarray] mimicking model.named_parameters().
    Parameters whose name matches 'bn|bias|activation' are excluded.
    Returns sum_p ||w_p||_2 * reg_lambda.
    """
    included = [
        w for name, w in named_params.items()
        if not _EXCLUDE_REGEX.search(name) and w.size > 0
    ]
    if not included:
        return jnp.float32(0.0)

    chunks = []
    pid_list = []
    for p, w in enumerate(included):
        flat = jnp.asarray(w, jnp.float32).reshape(-1)
        n = flat.shape[0]
        nblk = -(-n // BLOCK_ELEMS)                 # ceil div
        flat = jnp.pad(flat, (0, nblk * BLOCK_ELEMS - n))   # zeros: norm unchanged
        chunks.append(flat)
        pid_list.extend([p] * nblk)

    data = jnp.concatenate(chunks).reshape(-1, LANES)       # (total_blocks*512, 128)
    pid = jnp.asarray(pid_list, dtype=jnp.int32)            # (total_blocks,)
    total_blocks = pid.shape[0]
    num_params = len(included)

    out = pl.pallas_call(
        _l2_norms_kernel,
        out_shape=jax.ShapeDtypeStruct((num_params, 1, LANES), jnp.float32),
        grid_spec=pltpu.PrefetchScalarGridSpec(
            num_scalar_prefetch=1,
            grid=(total_blocks,),
            in_specs=[
                pl.BlockSpec((BLOCK_ROWS, LANES), lambda i, pid_ref: (i, 0)),
            ],
            out_specs=pl.BlockSpec(
                (1, 1, LANES), lambda i, pid_ref: (pid_ref[i], 0, 0)),
            scratch_shapes=[pltpu.VMEM((BLOCK_ROWS, LANES), jnp.float32)],
        ),
        compiler_params=pltpu.CompilerParams(
            dimension_semantics=("arbitrary",)),
    )(pid, data)

    norms = out[:, 0, 0]                                    # (num_params,)
    return jnp.sum(norms) * jnp.float32(reg_lambda)


def _make_synthetic_model_params(key):
    """Deterministic synthetic 'model' parameter set (shapes only matter)."""
    keys = jax.random.split(key, 8)
    return {
        # included in the regularization term
        "conv1.weight": jax.random.normal(keys[0], (4, 3, 3, 3), jnp.float32),
        "conv2.weight": jax.random.normal(keys[1], (8, 4, 3, 3), jnp.float32),
        "fc1.weight":   jax.random.normal(keys[2], (256, 300), jnp.float32),  # spans 2 blocks
        "fc2.weight":   jax.random.normal(keys[3], (8, 64), jnp.float32),
        # excluded by the regex
        "conv1.bias":   jax.random.normal(keys[4], (4,), jnp.float32),
        "bn1.weight":   jax.random.normal(keys[5], (4,), jnp.float32),
        "bn1.bias":     jax.random.normal(keys[6], (4,), jnp.float32),
        "fc1.bias":     jnp.zeros((256,), jnp.float32),
    }


if __name__ == "__main__":
    key = jax.random.PRNGKey(0)
    params = _make_synthetic_model_params(key)
    reg_lambda = 0.01

    loss = jax.block_until_ready(l2_regularization(params, reg_lambda))

    # Pure-JAX reference check (same exclusion rule, same math).
    ref = jnp.float32(0.0)
    for name, w in params.items():
        if _EXCLUDE_REGEX.search(name):
            continue
        ref = ref + jnp.sqrt(jnp.sum(jnp.square(w.astype(jnp.float32))))
    ref = ref * jnp.float32(reg_lambda)

    assert jnp.allclose(loss, ref, rtol=1e-5, atol=1e-5), (loss, ref)
    print("KERNEL_OK")
</pallas_src>

<mosaic_0001>
module attributes {stable_mosaic.version = 11 : i64} {
  func.func @_l2_norms_kernel(%arg0: i32, %arg1: memref<5xi32, #tpu.memory_space<smem>>, %arg2: memref<512x128xf32, #tpu.memory_space<vmem>>, %arg3: memref<1x1x128xf32, #tpu.memory_space<vmem>>, %arg4: memref<512x128xf32, #tpu.memory_space<vmem>>) attributes {dimension_semantics = [#tpu.dimension_semantics<arbitrary>], iteration_bounds = array<i64: 5>, scalar_prefetch = 1 : i64, scratch_operands = 1 : i64, tpu.core_type = #tpu.core_type<tc>, window_params = [{transform_indices = @transform_0, window_bounds = array<i64: 512, 128>}, {transform_indices = @transform_1, window_bounds = array<i64: 1, 1, 128>}]} {
    %0 = arith.index_cast %arg0 : i32 to index
    %1 = memref.load %arg1[%0] : memref<5xi32, #tpu.memory_space<smem>>
    %c1_i32 = arith.constant 1 : i32
    %2 = arith.subi %arg0, %c1_i32 : i32
    %c0_i32 = arith.constant 0 : i32
    %3 = arith.maxsi %2, %c0_i32 : i32
    %4 = arith.index_cast %3 : i32 to index
    %5 = memref.load %arg1[%4] : memref<5xi32, #tpu.memory_space<smem>>
    %c1_i32_0 = arith.constant 1 : i32
    %6 = arith.addi %arg0, %c1_i32_0 : i32
    %c4_i32 = arith.constant 4 : i32
    %7 = arith.minsi %6, %c4_i32 : i32
    %8 = arith.index_cast %7 : i32 to index
    %9 = memref.load %arg1[%8] : memref<5xi32, #tpu.memory_space<smem>>
    %c0_i32_1 = arith.constant 0 : i32
    %10 = arith.cmpi eq, %arg0, %c0_i32_1 : i32
    %11 = arith.cmpi ne, %5, %1 : i32
    %12 = arith.ori %10, %11 : i1
    %c4_i32_2 = arith.constant 4 : i32
    %13 = arith.cmpi eq, %arg0, %c4_i32_2 : i32
    %14 = arith.cmpi ne, %9, %1 : i32
    %15 = arith.ori %13, %14 : i1
    %16 = arith.extui %12 : i1 to i32
    %c0_i32_3 = arith.constant 0 : i32
    %17 = arith.cmpi ne, %16, %c0_i32_3 : i32
    scf.if %17 {
      %cst = arith.constant 0.000000e+00 : f32
      %25 = vector.broadcast %cst : f32 to vector<512x128xf32>
      %c0_10 = arith.constant 0 : index
      %c0_11 = arith.constant 0 : index
      %26 = vector.load %arg4[%c0_10, %c0_11] : memref<512x128xf32, #tpu.memory_space<vmem>>, vector<512x128xf32>
      tpu.vector_store %arg4[%c0_10, %c0_11], %25 {strides = array<i32>} : memref<512x128xf32, #tpu.memory_space<vmem>>, vector<512x128xf32>,
    } else {
    }
    %c0 = arith.constant 0 : index
    %c0_4 = arith.constant 0 : index
    %18 = vector.load %arg2[%c0, %c0_4] : memref<512x128xf32, #tpu.memory_space<vmem>>, vector<512x128xf32>
    %c0_5 = arith.constant 0 : index
    %c0_6 = arith.constant 0 : index
    %19 = vector.load %arg4[%c0_5, %c0_6] : memref<512x128xf32, #tpu.memory_space<vmem>>, vector<512x128xf32>
    %20 = arith.mulf %18, %18 : vector<512x128xf32>
    %21 = arith.addf %19, %20 : vector<512x128xf32>
    %c0_7 = arith.constant 0 : index
    %c0_8 = arith.constant 0 : index
    %22 = vector.load %arg4[%c0_7, %c0_8] : memref<512x128xf32, #tpu.memory_space<vmem>>, vector<512x128xf32>
    tpu.vector_store %arg4[%c0_7, %c0_8], %21 {strides = array<i32>} : memref<512x128xf32, #tpu.memory_space<vmem>>, vector<512x128xf32>,
    %23 = arith.extui %15 : i1 to i32
    %c0_i32_9 = arith.constant 0 : i32
    %24 = arith.cmpi ne, %23, %c0_i32_9 : i32
    scf.if %24 {
      %c0_10 = arith.constant 0 : index
      %c0_11 = arith.constant 0 : index
      %25 = vector.load %arg4[%c0_10, %c0_11] : memref<512x128xf32, #tpu.memory_space<vmem>>, vector<512x128xf32>
      %26 = vector.shape_cast %25 : vector<512x128xf32> to vector<1x512x128xf32>
      %cst = arith.constant dense<0.000000e+00> : vector<1xf32>
      %27 = vector.multi_reduction <add>, %26, %cst [1, 2] : vector<1x512x128xf32> to vector<1xf32>
      %28 = vector.shape_cast %27 : vector<1xf32> to vector<1x1x1xf32>
      %29 = vector.extract %28[0, 0, 0] : f32 from vector<1x1x1xf32>
      %30 = math.sqrt %29 : f32
      %31 = vector.broadcast %30 : f32 to vector<1x1x128xf32>
      %c0_12 = arith.constant 0 : index
      %c0_13 = arith.constant 0 : index
      %c0_14 = arith.constant 0 : index
      %32 = vector.load %arg3[%c0_12, %c0_13, %c0_14] : memref<1x1x128xf32, #tpu.memory_space<vmem>>, vector<1x1x128xf32>
      tpu.vector_store %arg3[%c0_12, %c0_13, %c0_14], %31 {strides = array<i32>} : memref<1x1x128xf32, #tpu.memory_space<vmem>>, vector<1x1x128xf32>,
    } else {
    }
    return
  }
  func.func @transform_0(%arg0: i32, %arg1: memref<5xi32, #tpu.memory_space<smem>>) -> (i32, i32) {
    %c0_i32 = arith.constant 0 : i32
    %c0_i32_0 = arith.constant 0 : i32
    return %arg0, %c0_i32 : i32, i32
  }
  func.func @transform_1(%arg0: i32, %arg1: memref<5xi32, #tpu.memory_space<smem>>) -> (i32, i32, i32) {
    %0 = arith.index_cast %arg0 : i32 to index
    %1 = memref.load %arg1[%0] : memref<5xi32, #tpu.memory_space<smem>>
    %c0_i32 = arith.constant 0 : i32
    %c0_i32_0 = arith.constant 0 : i32
    %c0_i32_1 = arith.constant 0 : i32
    return %1, %c0_i32, %c0_i32_0 : i32, i32, i32
  }
}

</mosaic_0001>

<llo_original>
// kernel: tpu_custom_call.1
$region0: #{tpu_custom_call.1}
  #allocation0 [shape = 'u32[]', space=smem, size = 0x4, offset = 0x4, fixed_abs, tag = 'smem constant byte address 0x4 - core index']
  #allocation1 [shape = 'u32[144,128]{1,0:T(1,128)}', space=vmem, size = 0x12000, scoped, tag = 'internal scratch']
  #allocation2 [shape = 'f32[512,128]{1,0:T(8,128)}', space=vmem, size = 0x40000, scoped, tag = 'scratch operand']
  #allocation3 [shape = 's32[1]{0}', space=sflag, size = 0x4, scoped, tag = 'scoped memory for tpu_custom_call.1']
  #allocation4 [shape = 'u8[512]{0}', space=smem, size = 0x200, scoped, tag = 'prefetched SMEM operand 0']
  %s0 = inlined_call_operand.hbm [shape: s32[5], index: 0, kind: input, shape index: {}]
  %s1 = inlined_call_operand.hbm [shape: f32[2560,128], index: 1, kind: input, shape index: {}]
  %s2 = inlined_call_operand.hbm [shape: f32[4,1,128], index: 2, kind: output, shape index: {}]
  %s3 = sld [smem:[#allocation0]]
  $region49: #{tpu_custom_call.1} parent=0
    _
  %s5 = ssub.s32 1, %s3
  %s6 = scalar_select 0, %s5, %s3
  %8 = dma.hbm_to_smem %s0, 16, [#allocation4], [#allocation3]
  %9 = dma.done [#allocation3], 16
  %10 = sfence
  $region1: #{tpu_custom_call.1} parent=0
    #allocation5 [shape = 'u8[524288]{0}', space=vmem, size = 0x80000, scoped, tag = 'input window, operand 1']
    #allocation6 [shape = 's32[2]{0}', space=sflag, size = 0x8, scoped, tag = 'scoped memory for tpu_custom_call.1']
    #allocation7 [shape = 's32[2]{0}', space=sflag, size = 0x8, scoped, tag = 'scoped memory for tpu_custom_call.1']
    #allocation8 [shape = 'u8[1024]{0}', space=vmem, size = 0x400, scoped, tag = 'output window, operand 0']
    %11 = vsyncpa [#allocation6], 0
    %s12 = scalar_lea.sflag [#allocation6], 1
    %13 = vsyncpa %s12, 0
    %14 = vsyncpa [#allocation7], 0
    %s15 = scalar_lea.sflag [#allocation7], 1
    %16 = vsyncpa %s15, 0
    loop: start=0, step=1, limit=7
    $region2: #{tpu_custom_call.1} parent=1 // loop_pre_header
      _
    $region3: #{tpu_custom_call.1} parent=1 // loop_header
      %s18 = sphi 0, %s22
      %p19 = scmp.ge.s32.totalorder %s18, 7
      %s28 = sphi 0, %s30
      %s31 = sphi 0, %s28
      %s32 = sphi 0, %s31
      %s48 = sphi 0, %s32
      %s56 = sphi 0, %s58
      %s59 = sphi 0, %s56
      %s60 = sphi 0, %s59
      %s76 = sphi 0, %s60
    $region4: #{tpu_custom_call.1} parent=1 // loop_header_branch
      %21 = sbr.rel (%p19) target = $region8
    $region5: #{tpu_custom_call.1} parent=1 // loop_body
      %s23 = ssub.s32 %s18, 1
      %s24 = ssub.s32 %s18, 2
      %s25 = sadd.s32 %s18, 1
      %s26 = ssub.s32 %s18, %s25
      %p27 = scmp.eq.s32.totalorder %s26, 0
      %s29 = sadd.s32 %s28, 1
      %s30 = scalar_select %p27, %s28, %s29
      %p33 = pneg %p27
      %p34 = scmp.eq.s32.totalorder %s18, 4
      %p35 = por %p33, %p34
      %p36 = scmp.ne.s32.totalorder %s28, %s31
      %p37 = scmp.eq.s32.totalorder %s18, 0
      %p38 = por %p36, %p37
      %p39 = scmp.ne.s32.totalorder %s28, %s31
      %p40 = scmp.eq.s32.totalorder %s23, 4
      %p41 = por %p39, %p40
      %p42 = scmp.ne.s32.totalorder %s31, %s32
      %p43 = scmp.eq.s32.totalorder %s23, 0
      %p44 = por %p42, %p43
      %p45 = scmp.ne.s32.totalorder %s31, %s32
      %p46 = scmp.eq.s32.totalorder %s24, 4
      %p47 = por %p45, %p46
      %p49 = scmp.ne.s32.totalorder %s32, %s48
      %p50 = scmp.eq.s32.totalorder %s24, 0
      %p51 = por %p49, %p50
      %s52 = sld [smem:[#allocation4 + %s18]]
      %s53 = sld [smem:[#allocation4 + %s25]]
      %s54 = ssub.s32 %s52, %s53
      %p55 = scmp.eq.s32.totalorder %s54, 0
      %s57 = sadd.s32 %s56, 1
      %s58 = scalar_select %p55, %s56, %s57
      %p61 = pneg %p55
      %p62 = scmp.eq.s32.totalorder %s18, 4
      %p63 = por %p61, %p62
      %p64 = scmp.ne.s32.totalorder %s56, %s59
      %p65 = scmp.eq.s32.totalorder %s18, 0
      %p66 = por %p64, %p65
      %p67 = scmp.ne.s32.totalorder %s56, %s59
      %p68 = scmp.eq.s32.totalorder %s23, 4
      %p69 = por %p67, %p68
      %p70 = scmp.ne.s32.totalorder %s59, %s60
      %p71 = scmp.eq.s32.totalorder %s23, 0
      %p72 = por %p70, %p71
      %p73 = scmp.ne.s32.totalorder %s59, %s60
      %p74 = scmp.eq.s32.totalorder %s24, 4
      %p75 = por %p73, %p74
      %p77 = scmp.ne.s32.totalorder %s60, %s76
      %p78 = scmp.eq.s32.totalorder %s24, 0
      %p79 = por %p77, %p78
      %p80 = scmp.le.s32.totalorder 1, %s18
      %p81 = scmp.lt.s32.totalorder %s18, 6
      %p82 = pnand %p80, %p81
      %p83 = pneg %p82
      // Predicated region
      $region9: #{tpu_custom_call.1} parent=5 // pred_check
        _
      $region10: #{tpu_custom_call.1} parent=5 // pred_check_branch
        %85 = sbr.rel (%p82) target = $region12
      $region11: #{tpu_custom_call.1} parent=5 // pred_region
        %s86 = ssub.s32 %s18, 1
      $region12: #{tpu_custom_call.1} parent=5 // pred_fallthru
        _
      %p87 = scmp.lt.s32.totalorder %s18, 5
      // Predicated region
      $region13: #{tpu_custom_call.1} parent=5 // pred_check
        %p88 = pneg %p87
      $region14: #{tpu_custom_call.1} parent=5 // pred_check_branch
        %90 = sbr.rel (%p88) target = $region16
      $region15: #{tpu_custom_call.1} parent=5 // pred_region
        // Predicated region
        $region17: #{tpu_custom_call.1} parent=15 // pred_check
          %p91 = pneg %p38
        $region18: #{tpu_custom_call.1} parent=15 // pred_check_branch
          %93 = sbr.rel (%p91) target = $region20
        $region19: #{tpu_custom_call.1} parent=15 // pred_region
          %s94 = sand.u32 %s28, 1
          %s95 = scalar_lea.sflag [#allocation6], %s94
          %s96 = sand.u32 %s28, 1
          %s97 = smul.addr %s96, 512
          %s98 = scalar_lea.vmem [#allocation5], %s97
          %s99 = smul.u32 64, %s18
          %s101 = ssub.s32 8192, 8192
          %102 = vsyncadd %s95, %s101
          %s103 = smul.addr %s99, 128
          %s104 = scalar_lea.hbm %s1, %s103
          %s105 = sshll.u32 %s98, 4
          %s106 = int_to_ptr.vmem [resolvable:$true] %s105
          %111 = dma.hbm_to_vmem [thread:$0]  %s104, 8192, %s106, %s95, 128, 128, 8
        $region20: #{tpu_custom_call.1} parent=15 // pred_fallthru
          _
      $region16: #{tpu_custom_call.1} parent=5 // pred_fallthru
        _
      %p112 = scmp.le.s32.totalorder 1, %s18
      %p113 = scmp.lt.s32.totalorder %s18, 6
      %p114 = pnand %p112, %p113
      %p115 = pneg %p114
      // Predicated region
      $region21: #{tpu_custom_call.1} parent=5 // pred_check
        _
      $region22: #{tpu_custom_call.1} parent=5 // pred_check_branch
        %117 = sbr.rel (%p114) target = $region24
      $region23: #{tpu_custom_call.1} parent=5 // pred_region
        %s118 = ssub.s32 %s18, 1
        %s119 = sand.u32 %s31, 1
        %s120 = scalar_lea.sflag [#allocation6], %s119
        %s121 = sand.u32 %s31, 1
        %s122 = smul.addr %s121, 512
        %s123 = scalar_lea.vmem [#allocation5], %s122
        // Predicated region
        $region25: #{tpu_custom_call.1} parent=23 // pred_check
          %p124 = pneg %p44
        $region26: #{tpu_custom_call.1} parent=23 // pred_check_branch
          %126 = sbr.rel (%p124) target = $region28
        $region27: #{tpu_custom_call.1} parent=23 // pred_region
          %127 = dma.done %s120, 8192
        $region28: #{tpu_custom_call.1} parent=23 // pred_fallthru
          _
        %s128 = sand.u32 %s31, 1
        %s129 = scalar_lea.sflag [#allocation6], %s128
        %s130 = sand.u32 %s31, 1
        %s131 = smul.addr %s130, 512
        %s132 = scalar_lea.vmem [#allocation5], %s131
        %p133 = pneg %p44
        %p134 = pneg %p41
        %p135 = pneg %p72
        %p136 = pneg %p69
        %s137 = sand.u32 %s59, 1
        %s138 = scalar_lea.sflag [#allocation7], %s137
        %s139 = sand.u32 %s59, 1
        %s140 = scalar_lea.vmem [#allocation8], %s139
        %s141 = smul.u32 64, %s23
        %s142 = sld [smem:[#allocation4 + %s23]]
        %s143 = sld [smem:[#allocation4 + %s23]]
        %s144 = ssub.s32 %s23, 1
        %p145 = scmp.gt.s32.totalorder %s144, 0
        %s146 = scalar_select %p145, %s144, 0
        %s147 = sld [smem:[#allocation4 + %s146]]
        %s148 = sadd.s32 %s23, 1
        %p149 = scmp.lt.s32.totalorder %s148, 4
        %s150 = scalar_select %p149, %s148, 4
        %s151 = sld [smem:[#allocation4 + %s150]]
        %p152 = scmp.eq.s32.totalorder %s23, 0
        %p153 = scmp.ne.s32.totalorder %s147, %s143
        %p154 = por %p152, %p153
        %p155 = scmp.eq.s32.totalorder %s23, 4
        %p156 = scmp.ne.s32.totalorder %s151, %s143
        %p157 = por %p155, %p156
        // Predicated region
        $region29: #{tpu_custom_call.1} parent=23 // pred_check
          %p158 = pneg %p154
        $region30: #{tpu_custom_call.1} parent=23 // pred_check_branch
          %160 = sbr.rel (%p158) target = $region32
        $region31: #{tpu_custom_call.1} parent=23 // pred_region
          %161 = vst [vmem:[#allocation2] sm:$0xff] 0.0
          %162 = vst [vmem:[#allocation2 + $0x8] sm:$0xff] 0.0
          %163 = vst [vmem:[#allocation2 + $0x10] sm:$0xff] 0.0
          %164 = vst [vmem:[#allocation2 + $0x18] sm:$0xff] 0.0
          %165 = vst [vmem:[#allocation2 + $0x20] sm:$0xff] 0.0
          %166 = vst [vmem:[#allocation2 + $0x28] sm:$0xff] 0.0
          %167 = vst [vmem:[#allocation2 + $0x30] sm:$0xff] 0.0
          %168 = vst [vmem:[#allocation2 + $0x38] sm:$0xff] 0.0
          %169 = vst [vmem:[#allocation2 + $0x40] sm:$0xff] 0.0
          %170 = vst [vmem:[#allocation2 + $0x48] sm:$0xff] 0.0
          %171 = vst [vmem:[#allocation2 + $0x50] sm:$0xff] 0.0
          %172 = vst [vmem:[#allocation2 + $0x58] sm:$0xff] 0.0
          %173 = vst [vmem:[#allocation2 + $0x60] sm:$0xff] 0.0
          %174 = vst [vmem:[#allocation2 + $0x68] sm:$0xff] 0.0
          %175 = vst [vmem:[#allocation2 + $0x70] sm:$0xff] 0.0
          %176 = vst [vmem:[#allocation2 + $0x78] sm:$0xff] 0.0
          %177 = vst [vmem:[#allocation2 + $0x80] sm:$0xff] 0.0
          %178 = vst [vmem:[#allocation2 + $0x88] sm:$0xff] 0.0
          %179 = vst [vmem:[#allocation2 + $0x90] sm:$0xff] 0.0
          %180 = vst [vmem:[#allocation2 + $0x98] sm:$0xff] 0.0
          %181 = vst [vmem:[#allocation2 + $0xa0] sm:$0xff] 0.0
          %182 = vst [vmem:[#allocation2 + $0xa8] sm:$0xff] 0.0
          %183 = vst [vmem:[#allocation2 + $0xb0] sm:$0xff] 0.0
          %184 = vst [vmem:[#allocation2 + $0xb8] sm:$0xff] 0.0
          %185 = vst [vmem:[#allocation2 + $0xc0] sm:$0xff] 0.0
          %186 = vst [vmem:[#allocation2 + $0xc8] sm:$0xff] 0.0
          %187 = vst [vmem:[#allocation2 + $0xd0] sm:$0xff] 0.0
          %188 = vst [vmem:[#allocation2 + $0xd8] sm:$0xff] 0.0
          %189 = vst [vmem:[#allocation2 + $0xe0] sm:$0xff] 0.0
          %190 = vst [vmem:[#allocation2 + $0xe8] sm:$0xff] 0.0
          %191 = vst [vmem:[#allocation2 + $0xf0] sm:$0xff] 0.0
          %192 = vst [vmem:[#allocation2 + $0xf8] sm:$0xff] 0.0
          %193 = vst [vmem:[#allocation2 + $0x100] sm:$0xff] 0.0
          %194 = vst [vmem:[#allocation2 + $0x108] sm:$0xff] 0.0
          %195 = vst [vmem:[#allocation2 + $0x110] sm:$0xff] 0.0
          %196 = vst [vmem:[#allocation2 + $0x118] sm:$0xff] 0.0
          %197 = vst [vmem:[#allocation2 + $0x120] sm:$0xff] 0.0
          %198 = vst [vmem:[#allocation2 + $0x128] sm:$0xff] 0.0
          %199 = vst [vmem:[#allocation2 + $0x130] sm:$0xff] 0.0
          %200 = vst [vmem:[#allocation2 + $0x138] sm:$0xff] 0.0
          %201 = vst [vmem:[#allocation2 + $0x140] sm:$0xff] 0.0
          %202 = vst [vmem:[#allocation2 + $0x148] sm:$0xff] 0.0
          %203 = vst [vmem:[#allocation2 + $0x150] sm:$0xff] 0.0
          %204 = vst [vmem:[#allocation2 + $0x158] sm:$0xff] 0.0
          %205 = vst [vmem:[#allocation2 + $0x160] sm:$0xff] 0.0
          %206 = vst [vmem:[#allocation2 + $0x168] sm:$0xff] 0.0
          %207 = vst [vmem:[#allocation2 + $0x170] sm:$0xff] 0.0
          %208 = vst [vmem:[#allocation2 + $0x178] sm:$0xff] 0.0
          %209 = vst [vmem:[#allocation2 + $0x180] sm:$0xff] 0.0
          %210 = vst [vmem:[#allocation2 + $0x188] sm:$0xff] 0.0
          %211 = vst [vmem:[#allocation2 + $0x190] sm:$0xff] 0.0
          %212 = vst [vmem:[#allocation2 + $0x198] sm:$0xff] 0.0
          %213 = vst [vmem:[#allocation2 + $0x1a0] sm:$0xff] 0.0
          %214 = vst [vmem:[#allocation2 + $0x1a8] sm:$0xff] 0.0
          %215 = vst [vmem:[#allocation2 + $0x1b0] sm:$0xff] 0.0
          %216 = vst [vmem:[#allocation2 + $0x1b8] sm:$0xff] 0.0
          %217 = vst [vmem:[#allocation2 + $0x1c0] sm:$0xff] 0.0
          %218 = vst [vmem:[#allocation2 + $0x1c8] sm:$0xff] 0.0
          %219 = vst [vmem:[#allocation2 + $0x1d0] sm:$0xff] 0.0
          %220 = vst [vmem:[#allocation2 + $0x1d8] sm:$0xff] 0.0
          %221 = vst [vmem:[#allocation2 + $0x1e0] sm:$0xff] 0.0
          %222 = vst [vmem:[#allocation2 + $0x1e8] sm:$0xff] 0.0
          %223 = vst [vmem:[#allocation2 + $0x1f0] sm:$0xff] 0.0
          %224 = vst [vmem:[#allocation2 + $0x1f8] sm:$0xff] 0.0
        $region32: #{tpu_custom_call.1} parent=23 // pred_fallthru
          _
        %v225 = vld [vmem:[%s123] sm:$0xff]
        %v226 = vld [vmem:[%s123 + $0x8] sm:$0xff]
        %v227 = vld [vmem:[%s123 + $0x10] sm:$0xff]
        %v228 = vld [vmem:[%s123 + $0x18] sm:$0xff]
        %v229 = vld [vmem:[%s123 + $0x20] sm:$0xff]
        %v230 = vld [vmem:[%s123 + $0x28] sm:$0xff]
        %v231 = vld [vmem:[%s123 + $0x30] sm:$0xff]
        %v232 = vld [vmem:[%s123 + $0x38] sm:$0xff]
        %v233 = vld [vmem:[%s123 + $0x40] sm:$0xff]
        %v234 = vld [vmem:[%s123 + $0x48] sm:$0xff]
        %v235 = vld [vmem:[%s123 + $0x50] sm:$0xff]
        %v236 = vld [vmem:[%s123 + $0x58] sm:$0xff]
        %v237 = vld [vmem:[%s123 + $0x60] sm:$0xff]
        %v238 = vld [vmem:[%s123 + $0x68] sm:$0xff]
        %v239 = vld [vmem:[%s123 + $0x70] sm:$0xff]
        %v240 = vld [vmem:[%s123 + $0x78] sm:$0xff]
        %v241 = vld [vmem:[%s123 + $0x80] sm:$0xff]
        %v242 = vld [vmem:[%s123 + $0x88] sm:$0xff]
        %v243 = vld [vmem:[%s123 + $0x90] sm:$0xff]
        %v244 = vld [vmem:[%s123 + $0x98] sm:$0xff]
        %v245 = vld [vmem:[%s123 + $0xa0] sm:$0xff]
        %v246 = vld [vmem:[%s123 + $0xa8] sm:$0xff]
        %v247 = vld [vmem:[%s123 + $0xb0] sm:$0xff]
        %v248 = vld [vmem:[%s123 + $0xb8] sm:$0xff]
        %v249 = vld [vmem:[%s123 + $0xc0] sm:$0xff]
        %v250 = vld [vmem:[%s123 + $0xc8] sm:$0xff]
        %v251 = vld [vmem:[%s123 + $0xd0] sm:$0xff]
        %v252 = vld [vmem:[%s123 + $0xd8] sm:$0xff]
        %v253 = vld [vmem:[%s123 + $0xe0] sm:$0xff]
        %v254 = vld [vmem:[%s123 + $0xe8] sm:$0xff]
        %v255 = vld [vmem:[%s123 + $0xf0] sm:$0xff]
        %v256 = vld [vmem:[%s123 + $0xf8] sm:$0xff]
        %v257 = vld [vmem:[%s123 + $0x100] sm:$0xff]
        %v258 = vld [vmem:[%s123 + $0x108] sm:$0xff]
        %v259 = vld [vmem:[%s123 + $0x110] sm:$0xff]
        %v260 = vld [vmem:[%s123 + $0x118] sm:$0xff]
        %v261 = vld [vmem:[%s123 + $0x120] sm:$0xff]
        %v262 = vld [vmem:[%s123 + $0x128] sm:$0xff]
        %v263 = vld [vmem:[%s123 + $0x130] sm:$0xff]
        %v264 = vld [vmem:[%s123 + $0x138] sm:$0xff]
        %v265 = vld [vmem:[%s123 + $0x140] sm:$0xff]
        %v266 = vld [vmem:[%s123 + $0x148] sm:$0xff]
        %v267 = vld [vmem:[%s123 + $0x150] sm:$0xff]
        %v268 = vld [vmem:[%s123 + $0x158] sm:$0xff]
        %v269 = vld [vmem:[%s123 + $0x160] sm:$0xff]
        %v270 = vld [vmem:[%s123 + $0x168] sm:$0xff]
        %v271 = vld [vmem:[%s123 + $0x170] sm:$0xff]
        %v272 = vld [vmem:[%s123 + $0x178] sm:$0xff]
        %v273 = vld [vmem:[%s123 + $0x180] sm:$0xff]
        %v274 = vld [vmem:[%s123 + $0x188] sm:$0xff]
        %v275 = vld [vmem:[%s123 + $0x190] sm:$0xff]
        %v276 = vld [vmem:[%s123 + $0x198] sm:$0xff]
        %v277 = vld [vmem:[%s123 + $0x1a0] sm:$0xff]
        %v278 = vld [vmem:[%s123 + $0x1a8] sm:$0xff]
        %v279 = vld [vmem:[%s123 + $0x1b0] sm:$0xff]
        %v280 = vld [vmem:[%s123 + $0x1b8] sm:$0xff]
        %v281 = vld [vmem:[%s123 + $0x1c0] sm:$0xff]
        %v282 = vld [vmem:[%s123 + $0x1c8] sm:$0xff]
        %v283 = vld [vmem:[%s123 + $0x1d0] sm:$0xff]
        %v284 = vld [vmem:[%s123 + $0x1d8] sm:$0xff]
        %v285 = vld [vmem:[%s123 + $0x1e0] sm:$0xff]
        %v286 = vld [vmem:[%s123 + $0x1e8] sm:$0xff]
        %v287 = vld [vmem:[%s123 + $0x1f0] sm:$0xff]
        %v288 = vld [vmem:[%s123 + $0x1f8] sm:$0xff]
        %v289 = vld [vmem:[#allocation2] sm:$0xff]
        %v290 = vld [vmem:[#allocation2 + $0x8] sm:$0xff]
        %v291 = vld [vmem:[#allocation2 + $0x10] sm:$0xff]
        %v292 = vld [vmem:[#allocation2 + $0x18] sm:$0xff]
        %v293 = vld [vmem:[#allocation2 + $0x20] sm:$0xff]
        %v294 = vld [vmem:[#allocation2 + $0x28] sm:$0xff]
        %v295 = vld [vmem:[#allocation2 + $0x30] sm:$0xff]
        %v296 = vld [vmem:[#allocation2 + $0x38] sm:$0xff]
        %v297 = vld [vmem:[#allocation2 + $0x40] sm:$0xff]
        %v298 = vld [vmem:[#allocation2 + $0x48] sm:$0xff]
        %v299 = vld [vmem:[#allocation2 + $0x50] sm:$0xff]
        %v300 = vld [vmem:[#allocation2 + $0x58] sm:$0xff]
        %v301 = vld [vmem:[#allocation2 + $0x60] sm:$0xff]
        %v302 = vld [vmem:[#allocation2 + $0x68] sm:$0xff]
        %v303 = vld [vmem:[#allocation2 + $0x70] sm:$0xff]
        %v304 = vld [vmem:[#allocation2 + $0x78] sm:$0xff]
        %v305 = vld [vmem:[#allocation2 + $0x80] sm:$0xff]
        %v306 = vld [vmem:[#allocation2 + $0x88] sm:$0xff]
        %v307 = vld [vmem:[#allocation2 + $0x90] sm:$0xff]
        %v308 = vld [vmem:[#allocation2 + $0x98] sm:$0xff]
        %v309 = vld [vmem:[#allocation2 + $0xa0] sm:$0xff]
        %v310 = vld [vmem:[#allocation2 + $0xa8] sm:$0xff]
        %v311 = vld [vmem:[#allocation2 + $0xb0] sm:$0xff]
        %v312 = vld [vmem:[#allocation2 + $0xb8] sm:$0xff]
        %v313 = vld [vmem:[#allocation2 + $0xc0] sm:$0xff]
        %v314 = vld [vmem:[#allocation2 + $0xc8] sm:$0xff]
        %v315 = vld [vmem:[#allocation2 + $0xd0] sm:$0xff]
        %v316 = vld [vmem:[#allocation2 + $0xd8] sm:$0xff]
        %v317 = vld [vmem:[#allocation2 + $0xe0] sm:$0xff]
        %v318 = vld [vmem:[#allocation2 + $0xe8] sm:$0xff]
        %v319 = vld [vmem:[#allocation2 + $0xf0] sm:$0xff]
        %v320 = vld [vmem:[#allocation2 + $0xf8] sm:$0xff]
        %v321 = vld [vmem:[#allocation2 + $0x100] sm:$0xff]
        %v322 = vld [vmem:[#allocation2 + $0x108] sm:$0xff]
        %v323 = vld [vmem:[#allocation2 + $0x110] sm:$0xff]
        %v324 = vld [vmem:[#allocation2 + $0x118] sm:$0xff]
        %v325 = vld [vmem:[#allocation2 + $0x120] sm:$0xff]
        %v326 = vld [vmem:[#allocation2 + $0x128] sm:$0xff]
        %v327 = vld [vmem:[#allocation2 + $0x130] sm:$0xff]
        %v328 = vld [vmem:[#allocation2 + $0x138] sm:$0xff]
        %v329 = vld [vmem:[#allocation2 + $0x140] sm:$0xff]
        %v330 = vld [vmem:[#allocation2 + $0x148] sm:$0xff]
        %v331 = vld [vmem:[#allocation2 + $0x150] sm:$0xff]
        %v332 = vld [vmem:[#allocation2 + $0x158] sm:$0xff]
        %v333 = vld [vmem:[#allocation2 + $0x160] sm:$0xff]
        %v334 = vld [vmem:[#allocation2 + $0x168] sm:$0xff]
        %v335 = vld [vmem:[#allocation2 + $0x170] sm:$0xff]
        %v336 = vld [vmem:[#allocation2 + $0x178] sm:$0xff]
        %v337 = vld [vmem:[#allocation2 + $0x180] sm:$0xff]
        %v338 = vld [vmem:[#allocation2 + $0x188] sm:$0xff]
        %v339 = vld [vmem:[#allocation2 + $0x190] sm:$0xff]
        %v340 = vld [vmem:[#allocation2 + $0x198] sm:$0xff]
        %v341 = vld [vmem:[#allocation2 + $0x1a0] sm:$0xff]
        %v342 = vld [vmem:[#allocation2 + $0x1a8] sm:$0xff]
        %v343 = vld [vmem:[#allocation2 + $0x1b0] sm:$0xff]
        %v344 = vld [vmem:[#allocation2 + $0x1b8] sm:$0xff]
        %v345 = vld [vmem:[#allocation2 + $0x1c0] sm:$0xff]
        %v346 = vld [vmem:[#allocation2 + $0x1c8] sm:$0xff]
        %v347 = vld [vmem:[#allocation2 + $0x1d0] sm:$0xff]
        %v348 = vld [vmem:[#allocation2 + $0x1d8] sm:$0xff]
        %v349 = vld [vmem:[#allocation2 + $0x1e0] sm:$0xff]
        %v350 = vld [vmem:[#allocation2 + $0x1e8] sm:$0xff]
        %v351 = vld [vmem:[#allocation2 + $0x1f0] sm:$0xff]
        %v352 = vld [vmem:[#allocation2 + $0x1f8] sm:$0xff]
        %v353 = vmul.f32 %v225, %v225
        %v354 = vmul.f32 %v226, %v226
        %v355 = vmul.f32 %v227, %v227
        %v356 = vmul.f32 %v228, %v228
        %v357 = vmul.f32 %v229, %v229
        %v358 = vmul.f32 %v230, %v230
        %v359 = vmul.f32 %v231, %v231
        %v360 = vmul.f32 %v232, %v232
        %v361 = vmul.f32 %v233, %v233
        %v362 = vmul.f32 %v234, %v234
        %v363 = vmul.f32 %v235, %v235
        %v364 = vmul.f32 %v236, %v236
        %v365 = vmul.f32 %v237, %v237
        %v366 = vmul.f32 %v238, %v238
        %v367 = vmul.f32 %v239, %v239
        %v368 = vmul.f32 %v240, %v240
        %v369 = vmul.f32 %v241, %v241
        %v370 = vmul.f32 %v242, %v242
        %v371 = vmul.f32 %v243, %v243
        %v372 = vmul.f32 %v244, %v244
        %v373 = vmul.f32 %v245, %v245
        %v374 = vmul.f32 %v246, %v246
        %v375 = vmul.f32 %v247, %v247
        %v376 = vmul.f32 %v248, %v248
        %v377 = vmul.f32 %v249, %v249
        %v378 = vmul.f32 %v250, %v250
        %v379 = vmul.f32 %v251, %v251
        %v380 = vmul.f32 %v252, %v252
        %v381 = vmul.f32 %v253, %v253
        %v382 = vmul.f32 %v254, %v254
        %v383 = vmul.f32 %v255, %v255
        %v384 = vmul.f32 %v256, %v256
        %v385 = vmul.f32 %v257, %v257
        %v386 = vmul.f32 %v258, %v258
        %v387 = vmul.f32 %v259, %v259
        %v388 = vmul.f32 %v260, %v260
        %v389 = vmul.f32 %v261, %v261
        %v390 = vmul.f32 %v262, %v262
        %v391 = vmul.f32 %v263, %v263
        %v392 = vmul.f32 %v264, %v264
        %v393 = vmul.f32 %v265, %v265
        %v394 = vmul.f32 %v266, %v266
        %v395 = vmul.f32 %v267, %v267
        %v396 = vmul.f32 %v268, %v268
        %v397 = vmul.f32 %v269, %v269
        %v398 = vmul.f32 %v270, %v270
        %v399 = vmul.f32 %v271, %v271
        %v400 = vmul.f32 %v272, %v272
        %v401 = vmul.f32 %v273, %v273
        %v402 = vmul.f32 %v274, %v274
        %v403 = vmul.f32 %v275, %v275
        %v404 = vmul.f32 %v276, %v276
        %v405 = vmul.f32 %v277, %v277
        %v406 = vmul.f32 %v278, %v278
        %v407 = vmul.f32 %v279, %v279
        %v408 = vmul.f32 %v280, %v280
        %v409 = vmul.f32 %v281, %v281
        %v410 = vmul.f32 %v282, %v282
        %v411 = vmul.f32 %v283, %v283
        %v412 = vmul.f32 %v284, %v284
        %v413 = vmul.f32 %v285, %v285
        %v414 = vmul.f32 %v286, %v286
        %v415 = vmul.f32 %v287, %v287
        %v416 = vmul.f32 %v288, %v288
        %v417 = vadd.f32 %v289, %v353
        %v418 = vadd.f32 %v290, %v354
        %v419 = vadd.f32 %v291, %v355
        %v420 = vadd.f32 %v292, %v356
        %v421 = vadd.f32 %v293, %v357
        %v422 = vadd.f32 %v294, %v358
        %v423 = vadd.f32 %v295, %v359
        %v424 = vadd.f32 %v296, %v360
        %v425 = vadd.f32 %v297, %v361
        %v426 = vadd.f32 %v298, %v362
        %v427 = vadd.f32 %v299, %v363
        %v428 = vadd.f32 %v300, %v364
        %v429 = vadd.f32 %v301, %v365
        %v430 = vadd.f32 %v302, %v366
        %v431 = vadd.f32 %v303, %v367
        %v432 = vadd.f32 %v304, %v368
        %v433 = vadd.f32 %v305, %v369
        %v434 = vadd.f32 %v306, %v370
        %v435 = vadd.f32 %v307, %v371
        %v436 = vadd.f32 %v308, %v372
        %v437 = vadd.f32 %v309, %v373
        %v438 = vadd.f32 %v310, %v374
        %v439 = vadd.f32 %v311, %v375
        %v440 = vadd.f32 %v312, %v376
        %v441 = vadd.f32 %v313, %v377
        %v442 = vadd.f32 %v314, %v378
        %v443 = vadd.f32 %v315, %v379
        %v444 = vadd.f32 %v316, %v380
        %v445 = vadd.f32 %v317, %v381
        %v446 = vadd.f32 %v318, %v382
        %v447 = vadd.f32 %v319, %v383
        %v448 = vadd.f32 %v320, %v384
        %v449 = vadd.f32 %v321, %v385
        %v450 = vadd.f32 %v322, %v386
        %v451 = vadd.f32 %v323, %v387
        %v452 = vadd.f32 %v324, %v388
        %v453 = vadd.f32 %v325, %v389
        %v454 = vadd.f32 %v326, %v390
        %v455 = vadd.f32 %v327, %v391
        %v456 = vadd.f32 %v328, %v392
        %v457 = vadd.f32 %v329, %v393
        %v458 = vadd.f32 %v330, %v394
        %v459 = vadd.f32 %v331, %v395
        %v460 = vadd.f32 %v332, %v396
        %v461 = vadd.f32 %v333, %v397
        %v462 = vadd.f32 %v334, %v398
        %v463 = vadd.f32 %v335, %v399
        %v464 = vadd.f32 %v336, %v400
        %v465 = vadd.f32 %v337, %v401
        %v466 = vadd.f32 %v338, %v402
        %v467 = vadd.f32 %v339, %v403
        %v468 = vadd.f32 %v340, %v404
        %v469 = vadd.f32 %v341, %v405
        %v470 = vadd.f32 %v342, %v406
        %v471 = vadd.f32 %v343, %v407
        %v472 = vadd.f32 %v344, %v408
        %v473 = vadd.f32 %v345, %v409
        %v474 = vadd.f32 %v346, %v410
        %v475 = vadd.f32 %v347, %v411
        %v476 = vadd.f32 %v348, %v412
        %v477 = vadd.f32 %v349, %v413
        %v478 = vadd.f32 %v350, %v414
        %v479 = vadd.f32 %v351, %v415
        %v480 = vadd.f32 %v352, %v416
        %481 = vst [vmem:[#allocation2] sm:$0xff] %v417
        %482 = vst [vmem:[#allocation2 + $0x8] sm:$0xff] %v418
        %483 = vst [vmem:[#allocation2 + $0x10] sm:$0xff] %v419
        %484 = vst [vmem:[#allocation2 + $0x18] sm:$0xff] %v420
        %485 = vst [vmem:[#allocation2 + $0x20] sm:$0xff] %v421
        %486 = vst [vmem:[#allocation2 + $0x28] sm:$0xff] %v422
        %487 = vst [vmem:[#allocation2 + $0x30] sm:$0xff] %v423
        %488 = vst [vmem:[#allocation2 + $0x38] sm:$0xff] %v424
        %489 = vst [vmem:[#allocation2 + $0x40] sm:$0xff] %v425
        %490 = vst [vmem:[#allocation2 + $0x48] sm:$0xff] %v426
        %491 = vst [vmem:[#allocation2 + $0x50] sm:$0xff] %v427
        %492 = vst [vmem:[#allocation2 + $0x58] sm:$0xff] %v428
        %493 = vst [vmem:[#allocation2 + $0x60] sm:$0xff] %v429
        %494 = vst [vmem:[#allocation2 + $0x68] sm:$0xff] %v430
        %495 = vst [vmem:[#allocation2 + $0x70] sm:$0xff] %v431
        %496 = vst [vmem:[#allocation2 + $0x78] sm:$0xff] %v432
        %497 = vst [vmem:[#allocation2 + $0x80] sm:$0xff] %v433
        %498 = vst [vmem:[#allocation2 + $0x88] sm:$0xff] %v434
        %499 = vst [vmem:[#allocation2 + $0x90] sm:$0xff] %v435
        %500 = vst [vmem:[#allocation2 + $0x98] sm:$0xff] %v436
        %501 = vst [vmem:[#allocation2 + $0xa0] sm:$0xff] %v437
        %502 = vst [vmem:[#allocation2 + $0xa8] sm:$0xff] %v438
        %503 = vst [vmem:[#allocation2 + $0xb0] sm:$0xff] %v439
        %504 = vst [vmem:[#allocation2 + $0xb8] sm:$0xff] %v440
        %505 = vst [vmem:[#allocation2 + $0xc0] sm:$0xff] %v441
        %506 = vst [vmem:[#allocation2 + $0xc8] sm:$0xff] %v442
        %507 = vst [vmem:[#allocation2 + $0xd0] sm:$0xff] %v443
        %508 = vst [vmem:[#allocation2 + $0xd8] sm:$0xff] %v444
        %509 = vst [vmem:[#allocation2 + $0xe0] sm:$0xff] %v445
        %510 = vst [vmem:[#allocation2 + $0xe8] sm:$0xff] %v446
        %511 = vst [vmem:[#allocation2 + $0xf0] sm:$0xff] %v447
        %512 = vst [vmem:[#allocation2 + $0xf8] sm:$0xff] %v448
        %513 = vst [vmem:[#allocation2 + $0x100] sm:$0xff] %v449
        %514 = vst [vmem:[#allocation2 + $0x108] sm:$0xff] %v450
        %515 = vst [vmem:[#allocation2 + $0x110] sm:$0xff] %v451
        %516 = vst [vmem:[#allocation2 + $0x118] sm:$0xff] %v452
        %517 = vst [vmem:[#allocation2 + $0x120] sm:$0xff] %v453
        %518 = vst [vmem:[#allocation2 + $0x128] sm:$0xff] %v454
        %519 = vst [vmem:[#allocation2 + $0x130] sm:$0xff] %v455
        %520 = vst [vmem:[#allocation2 + $0x138] sm:$0xff] %v456
        %521 = vst [vmem:[#allocation2 + $0x140] sm:$0xff] %v457
        %522 = vst [vmem:[#allocation2 + $0x148] sm:$0xff] %v458
        %523 = vst [vmem:[#allocation2 + $0x150] sm:$0xff] %v459
        %524 = vst [vmem:[#allocation2 + $0x158] sm:$0xff] %v460
        %525 = vst [vmem:[#allocation2 + $0x160] sm:$0xff] %v461
        %526 = vst [vmem:[#allocation2 + $0x168] sm:$0xff] %v462
        %527 = vst [vmem:[#allocation2 + $0x170] sm:$0xff] %v463
        %528 = vst [vmem:[#allocation2 + $0x178] sm:$0xff] %v464
        %529 = vst [vmem:[#allocation2 + $0x180] sm:$0xff] %v465
        %530 = vst [vmem:[#allocation2 + $0x188] sm:$0xff] %v466
        %531 = vst [vmem:[#allocation2 + $0x190] sm:$0xff] %v467
        %532 = vst [vmem:[#allocation2 + $0x198] sm:$0xff] %v468
        %533 = vst [vmem:[#allocation2 + $0x1a0] sm:$0xff] %v469
        %534 = vst [vmem:[#allocation2 + $0x1a8] sm:$0xff] %v470
        %535 = vst [vmem:[#allocation2 + $0x1b0] sm:$0xff] %v471
        %536 = vst [vmem:[#allocation2 + $0x1b8] sm:$0xff] %v472
        %537 = vst [vmem:[#allocation2 + $0x1c0] sm:$0xff] %v473
        %538 = vst [vmem:[#allocation2 + $0x1c8] sm:$0xff] %v474
        %539 = vst [vmem:[#allocation2 + $0x1d0] sm:$0xff] %v475
        %540 = vst [vmem:[#allocation2 + $0x1d8] sm:$0xff] %v476
        %541 = vst [vmem:[#allocation2 + $0x1e0] sm:$0xff] %v477
        %542 = vst [vmem:[#allocation2 + $0x1e8] sm:$0xff] %v478
        %543 = vst [vmem:[#allocation2 + $0x1f0] sm:$0xff] %v479
        %544 = vst [vmem:[#allocation2 + $0x1f8] sm:$0xff] %v480
        // Predicated region
        $region33: #{tpu_custom_call.1} parent=23 // pred_check
          %p545 = pneg %p157
        $region34: #{tpu_custom_call.1} parent=23 // pred_check_branch
          %547 = sbr.rel (%p545) target = $region36
        $region35: #{tpu_custom_call.1} parent=23 // pred_region
          %v548 = vld [vmem:[#allocation2] sm:$0xff]
          %v549 = vld [vmem:[#allocation2 + $0x8] sm:$0xff]
          %v550 = vld [vmem:[#allocation2 + $0x10] sm:$0xff]
          %v551 = vld [vmem:[#allocation2 + $0x18] sm:$0xff]
          %v552 = vld [vmem:[#allocation2 + $0x20] sm:$0xff]
          %v553 = vld [vmem:[#allocation2 + $0x28] sm:$0xff]
          %v554 = vld [vmem:[#allocation2 + $0x30] sm:$0xff]
          %v555 = vld [vmem:[#allocation2 + $0x38] sm:$0xff]
          %v556 = vld [vmem:[#allocation2 + $0x40] sm:$0xff]
          %v557 = vld [vmem:[#allocation2 + $0x48] sm:$0xff]
          %v558 = vld [vmem:[#allocation2 + $0x50] sm:$0xff]
          %v559 = vld [vmem:[#allocation2 + $0x58] sm:$0xff]
          %v560 = vld [vmem:[#allocation2 + $0x60] sm:$0xff]
          %v561 = vld [vmem:[#allocation2 + $0x68] sm:$0xff]
          %v562 = vld [vmem:[#allocation2 + $0x70] sm:$0xff]
          %v563 = vld [vmem:[#allocation2 + $0x78] sm:$0xff]
          %v564 = vld [vmem:[#allocation2 + $0x80] sm:$0xff]
          %v565 = vld [vmem:[#allocation2 + $0x88] sm:$0xff]
          %v566 = vld [vmem:[#allocation2 + $0x90] sm:$0xff]
          %v567 = vld [vmem:[#allocation2 + $0x98] sm:$0xff]
          %v568 = vld [vmem:[#allocation2 + $0xa0] sm:$0xff]
          %v569 = vld [vmem:[#allocation2 + $0xa8] sm:$0xff]
          %v570 = vld [vmem:[#allocation2 + $0xb0] sm:$0xff]
          %v571 = vld [vmem:[#allocation2 + $0xb8] sm:$0xff]
          %v572 = vld [vmem:[#allocation2 + $0xc0] sm:$0xff]
          %v573 = vld [vmem:[#allocation2 + $0xc8] sm:$0xff]
          %v574 = vld [vmem:[#allocation2 + $0xd0] sm:$0xff]
          %v575 = vld [vmem:[#allocation2 + $0xd8] sm:$0xff]
          %v576 = vld [vmem:[#allocation2 + $0xe0] sm:$0xff]
          %v577 = vld [vmem:[#allocation2 + $0xe8] sm:$0xff]
          %v578 = vld [vmem:[#allocation2 + $0xf0] sm:$0xff]
          %v579 = vld [vmem:[#allocation2 + $0xf8] sm:$0xff]
          %v580 = vld [vmem:[#allocation2 + $0x100] sm:$0xff]
          %v581 = vld [vmem:[#allocation2 + $0x108] sm:$0xff]
          %v582 = vld [vmem:[#allocation2 + $0x110] sm:$0xff]
          %v583 = vld [vmem:[#allocation2 + $0x118] sm:$0xff]
          %v584 = vld [vmem:[#allocation2 + $0x120] sm:$0xff]
          %v585 = vld [vmem:[#allocation2 + $0x128] sm:$0xff]
          %v586 = vld [vmem:[#allocation2 + $0x130] sm:$0xff]
          %v587 = vld [vmem:[#allocation2 + $0x138] sm:$0xff]
          %v588 = vld [vmem:[#allocation2 + $0x140] sm:$0xff]
          %v589 = vld [vmem:[#allocation2 + $0x148] sm:$0xff]
          %v590 = vld [vmem:[#allocation2 + $0x150] sm:$0xff]
          %v591 = vld [vmem:[#allocation2 + $0x158] sm:$0xff]
          %v592 = vld [vmem:[#allocation2 + $0x160] sm:$0xff]
          %v593 = vld [vmem:[#allocation2 + $0x168] sm:$0xff]
          %v594 = vld [vmem:[#allocation2 + $0x170] sm:$0xff]
          %v595 = vld [vmem:[#allocation2 + $0x178] sm:$0xff]
          %v596 = vld [vmem:[#allocation2 + $0x180] sm:$0xff]
          %v597 = vld [vmem:[#allocation2 + $0x188] sm:$0xff]
          %v598 = vld [vmem:[#allocation2 + $0x190] sm:$0xff]
          %v599 = vld [vmem:[#allocation2 + $0x198] sm:$0xff]
          %v600 = vld [vmem:[#allocation2 + $0x1a0] sm:$0xff]
          %v601 = vld [vmem:[#allocation2 + $0x1a8] sm:$0xff]
          %v602 = vld [vmem:[#allocation2 + $0x1b0] sm:$0xff]
          %v603 = vld [vmem:[#allocation2 + $0x1b8] sm:$0xff]
          %v604 = vld [vmem:[#allocation2 + $0x1c0] sm:$0xff]
          %v605 = vld [vmem:[#allocation2 + $0x1c8] sm:$0xff]
          %v606 = vld [vmem:[#allocation2 + $0x1d0] sm:$0xff]
          %v607 = vld [vmem:[#allocation2 + $0x1d8] sm:$0xff]
          %v608 = vld [vmem:[#allocation2 + $0x1e0] sm:$0xff]
          %v609 = vld [vmem:[#allocation2 + $0x1e8] sm:$0xff]
          %v610 = vld [vmem:[#allocation2 + $0x1f0] sm:$0xff]
          %v611 = vld [vmem:[#allocation2 + $0x1f8] sm:$0xff]
          %v612 = vadd.f32 %v548, %v549
          %v613 = vadd.f32 %v612, %v550
          %v614 = vadd.f32 %v613, %v551
          %v615 = vadd.f32 %v614, %v552
          %v616 = vadd.f32 %v615, %v553
          %v617 = vadd.f32 %v616, %v554
          %v618 = vadd.f32 %v617, %v555
          %v619 = vadd.f32 %v618, %v556
          %v620 = vadd.f32 %v619, %v557
          %v621 = vadd.f32 %v620, %v558
          %v622 = vadd.f32 %v621, %v559
          %v623 = vadd.f32 %v622, %v560
          %v624 = vadd.f32 %v623, %v561
          %v625 = vadd.f32 %v624, %v562
          %v626 = vadd.f32 %v625, %v563
          %v627 = vadd.f32 %v626, %v564
          %v628 = vadd.f32 %v627, %v565
          %v629 = vadd.f32 %v628, %v566
          %v630 = vadd.f32 %v629, %v567
          %v631 = vadd.f32 %v630, %v568
          %v632 = vadd.f32 %v631, %v569
          %v633 = vadd.f32 %v632, %v570
          %v634 = vadd.f32 %v633, %v571
          %v635 = vadd.f32 %v634, %v572
          %v636 = vadd.f32 %v635, %v573
          %v637 = vadd.f32 %v636, %v574
          %v638 = vadd.f32 %v637, %v575
          %v639 = vadd.f32 %v638, %v576
          %v640 = vadd.f32 %v639, %v577
          %v641 = vadd.f32 %v640, %v578
          %v642 = vadd.f32 %v641, %v579
          %v643 = vadd.f32 %v642, %v580
          %v644 = vadd.f32 %v643, %v581
          %v645 = vadd.f32 %v644, %v582
          %v646 = vadd.f32 %v645, %v583
          %v647 = vadd.f32 %v646, %v584
          %v648 = vadd.f32 %v647, %v585
          %v649 = vadd.f32 %v648, %v586
          %v650 = vadd.f32 %v649, %v587
          %v651 = vadd.f32 %v650, %v588
          %v652 = vadd.f32 %v651, %v589
          %v653 = vadd.f32 %v652, %v590
          %v654 = vadd.f32 %v653, %v591
          %v655 = vadd.f32 %v654, %v592
          %v656 = vadd.f32 %v655, %v593
          %v657 = vadd.f32 %v656, %v594
          %v658 = vadd.f32 %v657, %v595
          %v659 = vadd.f32 %v658, %v596
          %v660 = vadd.f32 %v659, %v597
          %v661 = vadd.f32 %v660, %v598
          %v662 = vadd.f32 %v661, %v599
          %v663 = vadd.f32 %v662, %v600
          %v664 = vadd.f32 %v663, %v601
          %v665 = vadd.f32 %v664, %v602
          %v666 = vadd.f32 %v665, %v603
          %v667 = vadd.f32 %v666, %v604
          %v668 = vadd.f32 %v667, %v605
          %v669 = vadd.f32 %v668, %v606
          %v670 = vadd.f32 %v669, %v607
          %v671 = vadd.f32 %v670, %v608
          %v672 = vadd.f32 %v671, %v609
          %v673 = vadd.f32 %v672, %v610
          %v674 = vadd.f32 %v673, %v611
          %675 = vadd.xlane.f32.xlu0 %v674
          %v676 = vpop.xlane.xlu0 %675
          %v677 = vrot.slane %v676, 4
          %v678 = vadd.f32 %v676, %v677
          %v679 = vrot.slane %v678, 2
          %v680 = vadd.f32 %v678, %v679
          %v681 = vrot.slane %v680, 1
          %v682 = vadd.f32 %v680, %v681
          %s683 = vtos %v682
          %v684 = vstv %s683
          %v685 = vrsqrt.pop %v684
          %v686 = vmul.f32 %v684, %v685
          %vm687 = vcmp.eq.f32.partialorder %v684, inf
          %v688 = vsel %vm687, %v684, %v686
          %vm689 = vcmp.eq.f32.partialorder %v684, 0.0
          %v690 = vand.u32 %v684, 2147483648
          %v691 = vsel %vm689, %v690, %v688
          %s692 = vtos %v691
          %v693 = vstv %s692
          %694 = vst [vmem:[%s140] sm:$0x1] %v693
        $region36: #{tpu_custom_call.1} parent=23 // pred_fallthru
          _
        %s695 = sand.u32 %s59, 1
        %s696 = scalar_lea.sflag [#allocation7], %s695
        %s697 = sand.u32 %s59, 1
        %s698 = scalar_lea.vmem [#allocation8], %s697
        // Predicated region
        $region37: #{tpu_custom_call.1} parent=23 // pred_check
          %p699 = pneg %p69
        $region38: #{tpu_custom_call.1} parent=23 // pred_check_branch
          %701 = sbr.rel (%p699) target = $region40
        $region39: #{tpu_custom_call.1} parent=23 // pred_region
          %s702 = sld [smem:[#allocation4 + %s23]]
          %s704 = ssub.s32 16, 16
          %705 = vsyncadd %s696, %s704
          %s706 = smul.addr %s702, 16
          %s707 = scalar_lea.hbm %s2, %s706
          %s709 = sshll.u32 %s698, 4
          %s710 = int_to_ptr.vmem [resolvable:$true] %s709
          %712 = dma.vmem_to_hbm [thread:$0]  %s710, 16, %s707, %s696
        $region40: #{tpu_custom_call.1} parent=23 // pred_fallthru
          _
      $region24: #{tpu_custom_call.1} parent=5 // pred_fallthru
        _
      %p713 = scmp.le.s32.totalorder 2, %s18
      // Predicated region
      $region41: #{tpu_custom_call.1} parent=5 // pred_check
        %p714 = pneg %p713
      $region42: #{tpu_custom_call.1} parent=5 // pred_check_branch
        %716 = sbr.rel (%p714) target = $region44
      $region43: #{tpu_custom_call.1} parent=5 // pred_region
        %s717 = ssub.s32 %s18, 2
        // Predicated region
        $region45: #{tpu_custom_call.1} parent=43 // pred_check
          %p718 = pneg %p75
        $region46: #{tpu_custom_call.1} parent=43 // pred_check_branch
          %720 = sbr.rel (%p718) target = $region48
        $region47: #{tpu_custom_call.1} parent=43 // pred_region
          %s721 = sand.u32 %s60, 1
          %s722 = scalar_lea.sflag [#allocation7], %s721
          %s723 = sand.u32 %s60, 1
          %s724 = scalar_lea.vmem [#allocation8], %s723
          %725 = dma.done %s722, 16
        $region48: #{tpu_custom_call.1} parent=43 // pred_fallthru
          _
      $region44: #{tpu_custom_call.1} parent=5 // pred_fallthru
        _
    $region6: #{tpu_custom_call.1} parent=1 // loop_footer
      %s22 = sadd.s32 1, %s18
    $region7: #{tpu_custom_call.1} parent=1 // loop_footer_branch
      %17 = sbr.rel target = $region3
    $region8: #{tpu_custom_call.1} parent=1 // loop_exit
      _
    %726 = vsyncpa [#allocation6], 1
    %s727 = scalar_lea.sflag [#allocation6], 1
    %728 = vsyncpa %s727, 1
    %729 = vsyncpa [#allocation7], 1
    %s730 = scalar_lea.sflag [#allocation7], 1
    %731 = vsyncpa %s730, 1

</llo_original>
